<compile_context>
chip_gen: v7x
topology: tpu7x:2x2x1
jax: 0.10.0
libtpu: 0.0.40
codegen_flags: <defaults>
</compile_context>

<pallas_src>
import functools

import jax
import jax.numpy as jnp
from jax.experimental import pallas as pl
from jax.experimental.pallas import tpu as pltpu


# --------------------------------------------------------------------------
# Kernels
# --------------------------------------------------------------------------
def _ffn_resident_kernel(x_ref, w1_ref, b1_ref, w2_ref, b2_ref, o_ref):
    # x_ref: [tm, Dp]; w1_ref/w2_ref: [Dp, Dp] (resident); b*_ref: [1, Dp] f32.
    h = jnp.dot(x_ref[...], w1_ref[...], preferred_element_type=jnp.float32)
    h = jnp.maximum(h + b1_ref[...].astype(jnp.float32), 0.0)   # bias + ReLU in f32
    # Dropout(0.1) in eval mode is identity.
    y = jnp.dot(h.astype(w2_ref.dtype), w2_ref[...],
                preferred_element_type=jnp.float32)
    o_ref[...] = (y + b2_ref[...].astype(jnp.float32)).astype(o_ref.dtype)


def _ffn_stream_kernel(x_ref, w1_ref, b1_ref, w2_ref, b2_ref, o_ref, *maybe_acc):
    # x_ref:  [tm, Dp]            (full padded hidden dim, resident per row tile)
    # w1_ref: [Dp, tk]  b1_ref: [1, tk]   -- k-th column slab of W1 / b1
    # w2_ref: [tk, Dp]  b2_ref: [1, Dp]   -- k-th row slab of W2, full b2
    # o_ref:  [tm, Dp]; optional f32 accumulator scratch (only if o isn't f32).
    acc_ref = maybe_acc[0] if maybe_acc else o_ref   # f32 output: accumulate in place
    k = pl.program_id(1)

    @pl.when(k == 0)
    def _init():
        acc_ref[...] = jnp.zeros_like(acc_ref)

    h = jnp.dot(x_ref[...], w1_ref[...], preferred_element_type=jnp.float32)
    h = jnp.maximum(h + b1_ref[...].astype(jnp.float32), 0.0)
    # Dropout(0.1) in eval mode is identity.
    acc_ref[...] += jnp.dot(h.astype(w2_ref.dtype), w2_ref[...],
                            preferred_element_type=jnp.float32)

    @pl.when(k == pl.num_programs(1) - 1)
    def _finalize():
        o_ref[...] = (acc_ref[...] + b2_ref[...].astype(jnp.float32)).astype(o_ref.dtype)


# --------------------------------------------------------------------------
# Tiling / config selection
# --------------------------------------------------------------------------
def _round_up(a, m):
    return (a + m - 1) // m * m


def _cdiv(a, b):
    return -(-a // b)


def _pick_config(M, Dp, x_bytes, o_bytes, w_bytes, budget, needs_acc):
    """Returns (mode, tm, tk, vmem_footprint_bytes)."""
    # Sublane packing of the compute dtype: bf16 packs 16 rows per vreg group.
    row_pack = {1: 32, 2: 16}.get(x_bytes, 8)

    if M <= 256:
        tm = _round_up(M, row_pack)
    else:
        tm = 512
        # Guarantee >= 2 row tiles so both TensorCores (v7x megacore) get work.
        while _cdiv(M, tm) < 2 and tm > 256:
            tm //= 2

    bias_bytes = 4 * 2 * Dp * 4   # two (1, Dp) f32 biases, double-buffer-conservative

    # ---- full weight residency: each weight DMA'd from HBM exactly once ----
    def resident_fp(tm_):
        return (2 * tm_ * Dp * x_bytes        # x tile   (double-buffered)
                + 2 * tm_ * Dp * o_bytes      # out tile (double-buffered)
                + 4 * Dp * Dp * w_bytes       # W1 + W2 resident (2 bufs each)
                + bias_bytes)

    if resident_fp(tm) <= budget:
        return "resident", tm, Dp, resident_fp(tm)
    t = tm
    while t > max(row_pack, 128):             # shrinking tm can rescue residency
        t = max(t // 2, row_pack)
        if resident_fp(t) <= budget:
            return "resident", t, Dp, resident_fp(t)

    # ---- streaming fallback: W1 column / W2 row slabs over a K grid axis ----
    def stream_fp(tm_, tk_):
        return (2 * tm_ * Dp * x_bytes + 2 * tm_ * Dp * o_bytes
                + 4 * Dp * tk_ * w_bytes      # W1 slab + W2 slab (2 bufs each)
                + bias_bytes
                + (tm_ * Dp * 4 if needs_acc else 0))

    # tk: largest multiple of 128 dividing Dp that fits (prefers 256+ on v6e/v7x).
    tk_cands = [Dp // n for n in range(1, Dp // 128 + 1)
                if Dp % n == 0 and (Dp // n) % 128 == 0]

    tm_cands = []
    # Re-streamed weights scale with n_i -> bigger row tile raises intensity;
    # 1024 only on 128-MiB-VMEM parts (v5e/v6e), never blindly on v7x (64 MiB).
    if M >= 2048 and budget > 96 * 1024 * 1024:
        tm_cands.append(1024)
    tm_cands.append(tm)
    t = tm
    while t > 256:
        t //= 2
        tm_cands.append(t)

    best = None
    for tm_ in tm_cands:
        for tk_ in tk_cands:
            fp = stream_fp(tm_, tk_)
            if fp <= budget:
                return "stream", tm_, tk_, fp
            if best is None or fp < best[3]:
                best = ("stream", tm_, tk_, fp)
    return best   # over budget: caller clamps vmem_limit to the device cap


# --------------------------------------------------------------------------
# Wrappers
# --------------------------------------------------------------------------
def prepare_ffn_params(w1, b1, w2, b2, *, compute_dtype=jnp.bfloat16):
    """Pad weights to lane-dense Dp and cast to the MXU compute dtype.

    Call once per parameter set (outside the hot loop): hoists the per-call
    pad + f32->bf16 cast HBM traffic out of the forward pass.  w1/w2 are
    stored [in, out] (transpose of PyTorch's nn.Linear weight).
    """
    D = w1.shape[0]
    Dp = _round_up(D, 128)
    pw = ((0, Dp - D), (0, Dp - D))
    w1p = jnp.pad(w1, pw).astype(compute_dtype)
    w2p = jnp.pad(w2, pw).astype(compute_dtype)
    b1p = jnp.pad(b1, (0, Dp - D)).astype(jnp.float32).reshape(1, Dp)
    b2p = jnp.pad(b2, (0, Dp - D)).astype(jnp.float32).reshape(1, Dp)
    return w1p, b1p, w2p, b2p


@functools.partial(jax.jit, static_argnames=("vmem_budget_override",))
def feed_forward_prepared(x, w1p, b1p, w2p, b2p, *, vmem_budget_override=None):
    """FeedForward (eval mode) on pre-padded / pre-cast weights."""
    orig_shape = x.shape
    D = orig_shape[-1]
    Dp = w1p.shape[0]
    compute_dtype = w1p.dtype
    out_dtype = x.dtype

    x2 = x.reshape(-1, D)
    M = x2.shape[0]

    try:
        vmem_cap = int(pltpu.get_tpu_info().vmem_capacity_bytes)
    except Exception:
        vmem_cap = 64 * 1024 * 1024           # conservative (v7x per-core)
    budget = (vmem_budget_override if vmem_budget_override is not None
              else int(0.6 * vmem_cap))

    x_bytes = jnp.dtype(compute_dtype).itemsize
    o_bytes = jnp.dtype(out_dtype).itemsize
    needs_acc = out_dtype != jnp.float32      # f32 output accumulates in o_ref

    mode, tm, tk, fp = _pick_config(M, Dp, x_bytes, o_bytes, x_bytes,
                                    budget, needs_acc)

    Mp = _round_up(M, tm)
    n_i = Mp // tm
    # Zero padding is exact for this op (padded lanes/rows contribute 0 and
    # are sliced off below).
    xp = jnp.pad(x2, ((0, Mp - M), (0, Dp - D))).astype(compute_dtype)

    flops = 4 * Mp * Dp * Dp                  # two [Mp,Dp]x[Dp,Dp] matmuls
    wt_fetches = 1 if mode == "resident" else n_i
    bytes_accessed = (Mp * Dp * (x_bytes + o_bytes)
                      + wt_fetches * 2 * Dp * Dp * x_bytes + 4 * Dp * 4)
    vmem_limit = int(min(vmem_cap, max(32 << 20, int(1.25 * fp) + (2 << 20))))

    if mode == "resident":
        grid = (n_i,)
        in_specs = [
            pl.BlockSpec((tm, Dp), lambda i: (i, 0)),     # x row tile
            pl.BlockSpec((Dp, Dp), lambda i: (0, 0)),     # W1 (resident, 1 fetch)
            pl.BlockSpec((1, Dp), lambda i: (0, 0)),      # b1 (resident)
            pl.BlockSpec((Dp, Dp), lambda i: (0, 0)),     # W2 (resident, 1 fetch)
            pl.BlockSpec((1, Dp), lambda i: (0, 0)),      # b2 (resident)
        ]
        out_specs = pl.BlockSpec((tm, Dp), lambda i: (i, 0))
        scratch_shapes = []
        kernel = _ffn_resident_kernel
        dims = ("parallel",)
    else:
        n_k = Dp // tk
        grid = (n_i, n_k)                                 # reduction axis last
        in_specs = [
            pl.BlockSpec((tm, Dp), lambda i, k: (i, 0)),  # x row tile
            pl.BlockSpec((Dp, tk), lambda i, k: (0, k)),  # W1 column slab
            pl.BlockSpec((1, tk), lambda i, k: (0, k)),   # b1 slab
            pl.BlockSpec((tk, Dp), lambda i, k: (k, 0)),  # W2 row slab
            pl.BlockSpec((1, Dp), lambda i, k: (0, 0)),   # b2 (resident)
        ]
        out_specs = pl.BlockSpec((tm, Dp), lambda i, k: (i, 0))
        scratch_shapes = ([pltpu.VMEM((tm, Dp), jnp.float32)] if needs_acc else [])
        kernel = _ffn_stream_kernel
        dims = ("parallel", "arbitrary")

    out = pl.pallas_call(
        kernel,
        out_shape=jax.ShapeDtypeStruct((Mp, Dp), out_dtype),
        grid_spec=pltpu.PrefetchScalarGridSpec(
            num_scalar_prefetch=0,
            grid=grid,
            in_specs=in_specs,
            out_specs=out_specs,
            scratch_shapes=scratch_shapes,
        ),
        compiler_params=pltpu.CompilerParams(
            dimension_semantics=dims,
            vmem_limit_bytes=vmem_limit,
        ),
        cost_estimate=pl.CostEstimate(flops=int(flops), transcendentals=0,
                                      bytes_accessed=int(bytes_accessed)),
    )(xp, w1p, b1p, w2p, b2p)

    return out[:M, :D].reshape(orig_shape)


def feed_forward(x, w1, b1, w2, b2, *, use_bf16_matmul=True):
    """Convenience wrapper: prepares (pads/casts) weights on every call.

    Prefer prepare_ffn_params + feed_forward_prepared when parameters are
    reused across steps.  Default is the bf16 MXU path (f32 accumulation);
    use_bf16_matmul=False keeps the input dtype on the MXU (note: Mosaic's
    f32 matmul decomposition is not pinned to Precision.HIGHEST).
    """
    compute_dtype = jnp.bfloat16 if use_bf16_matmul else x.dtype
    prepared = prepare_ffn_params(w1, b1, w2, b2, compute_dtype=compute_dtype)
    return feed_forward_prepared(x, *prepared)


# --------------------------------------------------------------------------
# Reference / test
# --------------------------------------------------------------------------
def _init_params(key, D, dtype=jnp.float32):
    """Deterministic init mimicking nn.Linear default U(-1/sqrt(D), 1/sqrt(D))."""
    k1, k2, k3, k4 = jax.random.split(key, 4)
    bound = 1.0 / (D ** 0.5)
    # PyTorch weight is [out, in]; store transposed [in, out] for x @ W.
    w1 = jax.random.uniform(k1, (D, D), dtype, minval=-bound, maxval=bound)
    b1 = jax.random.uniform(k2, (D,), dtype, minval=-bound, maxval=bound)
    w2 = jax.random.uniform(k3, (D, D), dtype, minval=-bound, maxval=bound)
    b2 = jax.random.uniform(k4, (D,), dtype, minval=-bound, maxval=bound)
    return w1, b1, w2, b2


def _reference(x, w1, b1, w2, b2):
    D = x.shape[-1]
    hp = jax.lax.Precision.HIGHEST
    h = jnp.maximum(jnp.dot(x.reshape(-1, D), w1, precision=hp) + b1, 0.0)
    return (jnp.dot(h, w2, precision=hp) + b2).reshape(x.shape)


if __name__ == "__main__":
    key = jax.random.PRNGKey(0)

    # ---- Test 1: module-sized (B=2, S=8, D=32), f32 MXU path, tight parity --
    B, S, D = 2, 8, 32
    kx, kp, key = jax.random.split(key, 3)
    x = jax.random.normal(kx, (B, S, D), jnp.float32)
    w1, b1, w2, b2 = _init_params(kp, D)
    ref = _reference(x, w1, b1, w2, b2)

    y_f32 = feed_forward(x, w1, b1, w2, b2, use_bf16_matmul=False)
    jax.block_until_ready(y_f32)
    assert y_f32.shape == x.shape and y_f32.dtype == x.dtype
    assert jnp.allclose(y_f32, ref, atol=2e-5, rtol=2e-5)

    # ---- Test 2: same inputs, default bf16 MXU path (hoisted weight prep) ---
    prepared = prepare_ffn_params(w1, b1, w2, b2)          # pad/cast once
    y_bf16 = feed_forward_prepared(x, *prepared)
    jax.block_until_ready(y_bf16)
    assert y_bf16.shape == x.shape and y_bf16.dtype == x.dtype
    assert jnp.allclose(y_bf16, ref, atol=5e-2, rtol=5e-2)

    # ---- Test 3: padding (D=96 -> Dp=128) + 2 row tiles (M=600, tm=512) -----
    B2, S2, D2 = 3, 200, 96
    kx2, kp2, key = jax.random.split(key, 3)
    x_big = jax.random.normal(kx2, (B2, S2, D2), jnp.float32)
    params_big = _init_params(kp2, D2)
    y_big = feed_forward(x_big, *params_big)
    jax.block_until_ready(y_big)
    ref_big = _reference(x_big, *params_big)
    assert y_big.shape == x_big.shape and y_big.dtype == x_big.dtype
    assert jnp.allclose(y_big, ref_big, atol=5e-2, rtol=5e-2)

    # ---- Test 4: forced K-streaming path (tiny budget), f32 in -> no scratch
    B3, S3, D3 = 2, 64, 256
    kx3, kp3, key = jax.random.split(key, 3)
    x_str = jax.random.normal(kx3, (B3, S3, D3), jnp.float32)
    params_str = _init_params(kp3, D3)
    prep_str = prepare_ffn_params(*params_str)
    y_str = feed_forward_prepared(x_str, *prep_str, vmem_budget_override=1)
    jax.block_until_ready(y_str)
    ref_str = _reference(x_str, *params_str)
    assert jnp.allclose(y_str, ref_str, atol=5e-2, rtol=5e-2)

    # ---- Test 5: forced streaming, bf16 output (exercises f32 acc scratch) --
    x_bf = x_str.astype(jnp.bfloat16)
    y_str_bf = feed_forward_prepared(x_bf, *prep_str, vmem_budget_override=1)
    jax.block_until_ready(y_str_bf)
    assert y_str_bf.dtype == jnp.bfloat16
    assert jnp.allclose(y_str_bf.astype(jnp.float32), ref_str, atol=1e-1, rtol=1e-1)

    print("KERNEL_OK")
</pallas_src>

<mosaic_0001>
module attributes {stable_mosaic.version = 11 : i64} {
  func.func @_ffn_resident_kernel(%arg0: i32, %arg1: memref<16x128xf32, #tpu.memory_space<vmem>>, %arg2: memref<128x128xf32, #tpu.memory_space<vmem>>, %arg3: memref<1x128xf32, #tpu.memory_space<vmem>>, %arg4: memref<128x128xf32, #tpu.memory_space<vmem>>, %arg5: memref<1x128xf32, #tpu.memory_space<vmem>>, %arg6: memref<16x128xf32, #tpu.memory_space<vmem>>) attributes {dimension_semantics = [#tpu.dimension_semantics<parallel>], iteration_bounds = array<i64: 1>, scalar_prefetch = 0 : i64, scratch_operands = 0 : i64, tpu.core_type = #tpu.core_type<tc>, window_params = [{transform_indices = @transform_0, window_bounds = array<i64: 16, 128>}, {pipeline_mode = #tpu.pipeline_mode<synchronous>, transform_indices = @transform_1, window_bounds = array<i64: 128, 128>}, {pipeline_mode = #tpu.pipeline_mode<synchronous>, transform_indices = @transform_2, window_bounds = array<i64: 1, 128>}, {pipeline_mode = #tpu.pipeline_mode<synchronous>, transform_indices = @transform_3, window_bounds = array<i64: 128, 128>}, {pipeline_mode = #tpu.pipeline_mode<synchronous>, transform_indices = @transform_4, window_bounds = array<i64: 1, 128>}, {transform_indices = @transform_5, window_bounds = array<i64: 16, 128>}]} {
    %c0 = arith.constant 0 : index
    %c0_0 = arith.constant 0 : index
    %0 = vector.load %arg1[%c0, %c0_0] : memref<16x128xf32, #tpu.memory_space<vmem>>, vector<16x128xf32>
    %c0_1 = arith.constant 0 : index
    %c0_2 = arith.constant 0 : index
    %1 = vector.load %arg2[%c0_1, %c0_2] : memref<128x128xf32, #tpu.memory_space<vmem>>, vector<128x128xf32>
    %cst = arith.constant dense<0.000000e+00> : vector<16x128xf32>
    %2 = tpu.matmul %0, %1, %cst {dimension_numbers = #tpu.dot_dimension_numbers<[1], [0], [0], [1], [0, 0, 1, 1], [], []>} : vector<16x128xf32>, vector<128x128xf32>, vector<16x128xf32> -> vector<16x128xf32>
    %c0_3 = arith.constant 0 : index
    %c0_4 = arith.constant 0 : index
    %3 = vector.load %arg3[%c0_3, %c0_4] : memref<1x128xf32, #tpu.memory_space<vmem>>, vector<1x128xf32>
    %4 = vector.broadcast %3 : vector<1x128xf32> to vector<16x128xf32>
    %5 = arith.addf %2, %4 : vector<16x128xf32>
    %cst_5 = arith.constant 0.000000e+00 : f32
    %6 = vector.broadcast %cst_5 : f32 to vector<16x128xf32>
    %7 = arith.maximumf %5, %6 : vector<16x128xf32>
    %c0_6 = arith.constant 0 : index
    %c0_7 = arith.constant 0 : index
    %8 = vector.load %arg4[%c0_6, %c0_7] : memref<128x128xf32, #tpu.memory_space<vmem>>, vector<128x128xf32>
    %cst_8 = arith.constant dense<0.000000e+00> : vector<16x128xf32>
    %9 = tpu.matmul %7, %8, %cst_8 {dimension_numbers = #tpu.dot_dimension_numbers<[1], [0], [0], [1], [0, 0, 1, 1], [], []>} : vector<16x128xf32>, vector<128x128xf32>, vector<16x128xf32> -> vector<16x128xf32>
    %c0_9 = arith.constant 0 : index
    %c0_10 = arith.constant 0 : index
    %10 = vector.load %arg5[%c0_9, %c0_10] : memref<1x128xf32, #tpu.memory_space<vmem>>, vector<1x128xf32>
    %11 = vector.broadcast %10 : vector<1x128xf32> to vector<16x128xf32>
    %12 = arith.addf %9, %11 : vector<16x128xf32>
    %c0_11 = arith.constant 0 : index
    %c0_12 = arith.constant 0 : index
    %13 = vector.load %arg6[%c0_11, %c0_12] : memref<16x128xf32, #tpu.memory_space<vmem>>, vector<16x128xf32>
    tpu.vector_store %arg6[%c0_11, %c0_12], %12 {strides = array<i32>} : memref<16x128xf32, #tpu.memory_space<vmem>>, vector<16x128xf32>,
    return
  }
  func.func @transform_0(%arg0: i32) -> (i32, i32) {
    %c0_i32 = arith.constant 0 : i32
    %c0_i32_0 = arith.constant 0 : i32
    return %arg0, %c0_i32 : i32, i32
  }
  func.func @transform_1(%arg0: i32) -> (i32, i32) {
    %c0_i32 = arith.constant 0 : i32
    %c0_i32_0 = arith.constant 0 : i32
    %c0_i32_1 = arith.constant 0 : i32
    return %c0_i32, %c0_i32_0 : i32, i32
  }
  func.func @transform_2(%arg0: i32) -> (i32, i32) {
    %c0_i32 = arith.constant 0 : i32
    %c0_i32_0 = arith.constant 0 : i32
    %c0_i32_1 = arith.constant 0 : i32
    return %c0_i32, %c0_i32_0 : i32, i32
  }
  func.func @transform_3(%arg0: i32) -> (i32, i32) {
    %c0_i32 = arith.constant 0 : i32
    %c0_i32_0 = arith.constant 0 : i32
    %c0_i32_1 = arith.constant 0 : i32
    return %c0_i32, %c0_i32_0 : i32, i32
  }
  func.func @transform_4(%arg0: i32) -> (i32, i32) {
    %c0_i32 = arith.constant 0 : i32
    %c0_i32_0 = arith.constant 0 : i32
    %c0_i32_1 = arith.constant 0 : i32
    return %c0_i32, %c0_i32_0 : i32, i32
  }
  func.func @transform_5(%arg0: i32) -> (i32, i32) {
    %c0_i32 = arith.constant 0 : i32
    %c0_i32_0 = arith.constant 0 : i32
    return %arg0, %c0_i32 : i32, i32
  }
}

</mosaic_0001>

<llo_original>
// kernel: feed_forward_prepared.1
$region0: #{feed_forward_prepared.1}
  #allocation0 [shape = 'u32[]', space=smem, size = 0x4, offset = 0x4, fixed_abs, tag = 'smem constant byte address 0x4 - core index']
  #allocation1 [shape = 'u32[144,128]{1,0:T(1,128)}', space=vmem, size = 0x12000, scoped, tag = 'internal scratch']
  %s0 = inlined_call_operand.vmem [shape: f32[16,128], index: 0, kind: input, shape index: {}]
  %s1 = inlined_call_operand.hbm [shape: f32[128,128], index: 1, kind: input, shape index: {}]
  %s2 = inlined_call_operand.vmem [shape: f32[1,128], index: 2, kind: input, shape index: {}]
  %s3 = inlined_call_operand.hbm [shape: f32[128,128], index: 3, kind: input, shape index: {}]
  %s4 = inlined_call_operand.vmem [shape: f32[1,128], index: 4, kind: input, shape index: {}]
  %s5 = inlined_call_operand.vmem [shape: f32[16,128], index: 5, kind: output, shape index: {}]
  %s6 = sld [smem:[#allocation0]]
  $region38: #{feed_forward_prepared.1} parent=0
    _
  %s8 = ssub.s32 1, %s6
  %s9 = scalar_select 0, %s8, %s6
  $region1: #{feed_forward_prepared.1} parent=0
    #allocation2 [shape = 'u8[65536]{0}', space=vmem, size = 0x10000, scoped, tag = 'input window, operand 1, single buffered']
    #allocation3 [shape = 's32[1]{0}', space=sflag, size = 0x4, scoped, tag = 'scoped memory for feed_forward_prepared.1']
    #allocation4 [shape = 'u8[65536]{0}', space=vmem, size = 0x10000, scoped, tag = 'input window, operand 3, single buffered']
    #allocation5 [shape = 's32[1]{0}', space=sflag, size = 0x4, scoped, tag = 'scoped memory for feed_forward_prepared.1']
    %10 = vsyncpa [#allocation3], 0
    %11 = vsyncpa [#allocation5], 0
    // Predicated region
    $region2: #{feed_forward_prepared.1} parent=1 // pred_check
      _
    $region3: #{feed_forward_prepared.1} parent=1 // pred_check_branch
      %13 = sbr.rel (0) target = $region5
    $region4: #{feed_forward_prepared.1} parent=1 // pred_region
      _
    $region5: #{feed_forward_prepared.1} parent=1 // pred_fallthru
      _
    // Predicated region
    $region6: #{feed_forward_prepared.1} parent=1 // pred_check
      _
    $region7: #{feed_forward_prepared.1} parent=1 // pred_check_branch
      %15 = sbr.rel (0) target = $region9
    $region8: #{feed_forward_prepared.1} parent=1 // pred_region
      %s17 = ssub.s32 2048, 2048
      %18 = vsyncadd [#allocation3], %s17
      %s19 = sshll.u32 [#allocation2], 4
      %s20 = int_to_ptr.vmem [resolvable:$true] %s19
      %25 = dma.hbm_to_vmem [thread:$0]  %s1, 2048, %s20, [#allocation3], 128, 128, 8
    $region9: #{feed_forward_prepared.1} parent=1 // pred_fallthru
      _
    // Predicated region
    $region10: #{feed_forward_prepared.1} parent=1 // pred_check
      _
    $region11: #{feed_forward_prepared.1} parent=1 // pred_check_branch
      %27 = sbr.rel (0) target = $region13
    $region12: #{feed_forward_prepared.1} parent=1 // pred_region
      _
    $region13: #{feed_forward_prepared.1} parent=1 // pred_fallthru
      _
    // Predicated region
    $region14: #{feed_forward_prepared.1} parent=1 // pred_check
      _
    $region15: #{feed_forward_prepared.1} parent=1 // pred_check_branch
      %29 = sbr.rel (0) target = $region17
    $region16: #{feed_forward_prepared.1} parent=1 // pred_region
      %s31 = ssub.s32 2048, 2048
      %32 = vsyncadd [#allocation5], %s31
      %s33 = sshll.u32 [#allocation4], 4
      %s34 = int_to_ptr.vmem [resolvable:$true] %s33
      %39 = dma.hbm_to_vmem [thread:$0]  %s3, 2048, %s34, [#allocation5], 128, 128, 8
    $region17: #{feed_forward_prepared.1} parent=1 // pred_fallthru
      _
    // Predicated region
    $region18: #{feed_forward_prepared.1} parent=1 // pred_check
      _
    $region19: #{feed_forward_prepared.1} parent=1 // pred_check_branch
      %41 = sbr.rel (0) target = $region21
    $region20: #{feed_forward_prepared.1} parent=1 // pred_region
      _
    $region21: #{feed_forward_prepared.1} parent=1 // pred_fallthru
      _
    // Predicated region
    $region22: #{feed_forward_prepared.1} parent=1 // pred_check
      _
    $region23: #{feed_forward_prepared.1} parent=1 // pred_check_branch
      %43 = sbr.rel (0) target = $region25
    $region24: #{feed_forward_prepared.1} parent=1 // pred_region
      %44 = dma.done [#allocation3], 2048
    $region25: #{feed_forward_prepared.1} parent=1 // pred_fallthru
      _
    // Predicated region
    $region26: #{feed_forward_prepared.1} parent=1 // pred_check
      _
    $region27: #{feed_forward_prepared.1} parent=1 // pred_check_branch
      %46 = sbr.rel (0) target = $region29
    $region28: #{feed_forward_prepared.1} parent=1 // pred_region
      %47 = dma.done [#allocation5], 2048
    $region29: #{feed_forward_prepared.1} parent=1 // pred_fallthru
      _
    %v48 = vld [vmem:[%s0] sm:$0xff]
    %v49 = vld [vmem:[%s0 + $0x8] sm:$0xff]
    %v50 = vld [vmem:[#allocation2] sm:$0xff]
    %v51 = vld [vmem:[#allocation2 + $0x8] sm:$0xff]
    %v52 = vld [vmem:[#allocation2 + $0x10] sm:$0xff]
    %v53 = vld [vmem:[#allocation2 + $0x18] sm:$0xff]
    %v54 = vld [vmem:[#allocation2 + $0x20] sm:$0xff]
    %v55 = vld [vmem:[#allocation2 + $0x28] sm:$0xff]
    %v56 = vld [vmem:[#allocation2 + $0x30] sm:$0xff]
    %v57 = vld [vmem:[#allocation2 + $0x38] sm:$0xff]
    %v58 = vld [vmem:[#allocation2 + $0x40] sm:$0xff]
    %v59 = vld [vmem:[#allocation2 + $0x48] sm:$0xff]
    %v60 = vld [vmem:[#allocation2 + $0x50] sm:$0xff]
    %v61 = vld [vmem:[#allocation2 + $0x58] sm:$0xff]
    %v62 = vld [vmem:[#allocation2 + $0x60] sm:$0xff]
    %v63 = vld [vmem:[#allocation2 + $0x68] sm:$0xff]
    %v64 = vld [vmem:[#allocation2 + $0x70] sm:$0xff]
    %v65 = vld [vmem:[#allocation2 + $0x78] sm:$0xff]
    %v66 = vld [vmem:[%s2] sm:$0x1]
    %v68 = vlaneseq
    %v69 = vshrl.u32 %v68, 7
    %v70 = vsub.s32 0, %v69
    %v71 = vrot.slane %v66, %v70
    %73 = vmatprep.subr.mxu0 0.0
    %74 = vmatpush1.msra.mxu0 %v50
    %75 = vmatprep.subr.mxu0 0.0
    %76 = vmatpush1.msra.mxu0 %v51
    %77 = vmatprep.subr.mxu0 0.0
    %78 = vmatpush1.msra.mxu0 %v52
    %79 = vmatprep.subr.mxu0 0.0
    %80 = vmatpush1.msra.mxu0 %v53
    %81 = vmatprep.subr.mxu0 0.0
    %82 = vmatpush1.msra.mxu0 %v54
    %83 = vmatprep.subr.mxu0 0.0
    %84 = vmatpush1.msra.mxu0 %v55
    %85 = vmatprep.subr.mxu0 0.0
    %86 = vmatpush1.msra.mxu0 %v56
    %87 = vmatprep.subr.mxu0 0.0
    %88 = vmatpush1.msra.mxu0 %v57
    %89 = vmatprep.subr.mxu0 0.0
    %90 = vmatpush1.msra.mxu0 %v58
    %91 = vmatprep.subr.mxu0 0.0
    %92 = vmatpush1.msra.mxu0 %v59
    %93 = vmatprep.subr.mxu0 0.0
    %94 = vmatpush1.msra.mxu0 %v60
    %95 = vmatprep.subr.mxu0 0.0
    %96 = vmatpush1.msra.mxu0 %v61
    %97 = vmatprep.subr.mxu0 0.0
    %98 = vmatpush1.msra.mxu0 %v62
    %99 = vmatprep.subr.mxu0 0.0
    %100 = vmatpush1.msra.mxu0 %v63
    %101 = vmatprep.subr.mxu0 0.0
    %102 = vmatpush1.msra.mxu0 %v64
    %103 = vmatprep.subr.mxu0 0.0
    %104 = vmatpush1.msra.mxu0 %v65
    %105 = vmatprep.subr.mxu0 0.0
    %106 = vmatpush1.msra.mxu0 0.0
    %107 = vmatprep.subr.mxu0 0.0
    %108 = vmatpush1.msra.mxu0 0.0
    %109 = vmatprep.subr.mxu0 0.0
    %110 = vmatpush1.msra.mxu0 0.0
    %111 = vmatprep.subr.mxu0 0.0
    %112 = vmatpush1.msra.mxu0 0.0
    %113 = vmatprep.subr.mxu0 0.0
    %114 = vmatpush1.msra.mxu0 0.0
    %115 = vmatprep.subr.mxu0 0.0
    %116 = vmatpush1.msra.mxu0 0.0
    %117 = vmatprep.subr.mxu0 0.0
    %118 = vmatpush1.msra.mxu0 0.0
    %119 = vmatprep.subr.mxu0 0.0
    %120 = vmatpush1.msra.mxu0 0.0
    %121 = vmatprep.subr.mxu0 0.0
    %122 = vmatpush1.msra.mxu0 0.0
    %123 = vmatprep.subr.mxu0 0.0
    %124 = vmatpush1.msra.mxu0 0.0
    %125 = vmatprep.subr.mxu0 0.0
    %126 = vmatpush1.msra.mxu0 0.0
    %127 = vmatprep.subr.mxu0 0.0
    %128 = vmatpush1.msra.mxu0 0.0
    %129 = vmatprep.subr.mxu0 0.0
    %130 = vmatpush1.msra.mxu0 0.0
    %131 = vmatprep.subr.mxu0 0.0
    %132 = vmatpush1.msra.mxu0 0.0
    %133 = vmatprep.subr.mxu0 0.0
    %134 = vmatpush1.msra.mxu0 0.0
    %135 = vmatprep.subr.mxu0 0.0
    %136 = vmatpush1.msra.mxu0 0.0
    %137 = vmatprep.mubr.f32.mxu0 0.0
    %138 = vmatmul.mubr.f32.gmra.mrb[0].mxu0 %v48
    %v139 = vpop.f32.mrb[0].mxu0
    %v140 = vadd.f32 %v71, %v139
    %v141 = vpop.f32.mrb[0].mxu0
    %142 = vmatprep.mubr.f32.mxu0 0.0
    %143 = vmatmul.mubr.f32.gmra.mrb[0].mxu0 %v49
    %v144 = vpop.f32.mrb[0].mxu0
    %v145 = vadd.f32 %v71, %v144
    %v146 = vpop.f32.mrb[0].mxu0
    %147 = vdwg.mxu0
    %v148 = vmax.f32 %v140, 0.0
    %v149 = vmax.f32 %v145, 0.0
    %v150 = vld [vmem:[#allocation4] sm:$0xff]
    %v151 = vld [vmem:[#allocation4 + $0x8] sm:$0xff]
    %v152 = vld [vmem:[#allocation4 + $0x10] sm:$0xff]
    %v153 = vld [vmem:[#allocation4 + $0x18] sm:$0xff]
    %v154 = vld [vmem:[#allocation4 + $0x20] sm:$0xff]
    %v155 = vld [vmem:[#allocation4 + $0x28] sm:$0xff]
    %v156 = vld [vmem:[#allocation4 + $0x30] sm:$0xff]
    %v157 = vld [vmem:[#allocation4 + $0x38] sm:$0xff]
    %v158 = vld [vmem:[#allocation4 + $0x40] sm:$0xff]
    %v159 = vld [vmem:[#allocation4 + $0x48] sm:$0xff]
    %v160 = vld [vmem:[#allocation4 + $0x50] sm:$0xff]
    %v161 = vld [vmem:[#allocation4 + $0x58] sm:$0xff]
    %v162 = vld [vmem:[#allocation4 + $0x60] sm:$0xff]
    %v163 = vld [vmem:[#allocation4 + $0x68] sm:$0xff]
    %v164 = vld [vmem:[#allocation4 + $0x70] sm:$0xff]
    %v165 = vld [vmem:[#allocation4 + $0x78] sm:$0xff]
    %v166 = vld [vmem:[%s4] sm:$0x1]
    %v168 = vlaneseq
    %v169 = vshrl.u32 %v168, 7
    %v170 = vsub.s32 0, %v169
    %v171 = vrot.slane %v166, %v170
    %173 = vmatprep.subr.mxu0 0.0
    %174 = vmatpush1.msra.mxu0 %v150
    %175 = vmatprep.subr.mxu0 0.0
    %176 = vmatpush1.msra.mxu0 %v151
    %177 = vmatprep.subr.mxu0 0.0
    %178 = vmatpush1.msra.mxu0 %v152
    %179 = vmatprep.subr.mxu0 0.0
    %180 = vmatpush1.msra.mxu0 %v153
    %181 = vmatprep.subr.mxu0 0.0
    %182 = vmatpush1.msra.mxu0 %v154
    %183 = vmatprep.subr.mxu0 0.0
    %184 = vmatpush1.msra.mxu0 %v155
    %185 = vmatprep.subr.mxu0 0.0
    %186 = vmatpush1.msra.mxu0 %v156
    %187 = vmatprep.subr.mxu0 0.0
    %188 = vmatpush1.msra.mxu0 %v157
    %189 = vmatprep.subr.mxu0 0.0
    %190 = vmatpush1.msra.mxu0 %v158
    %191 = vmatprep.subr.mxu0 0.0
    %192 = vmatpush1.msra.mxu0 %v159
    %193 = vmatprep.subr.mxu0 0.0
    %194 = vmatpush1.msra.mxu0 %v160
    %195 = vmatprep.subr.mxu0 0.0
    %196 = vmatpush1.msra.mxu0 %v161
    %197 = vmatprep.subr.mxu0 0.0
    %198 = vmatpush1.msra.mxu0 %v162
    %199 = vmatprep.subr.mxu0 0.0
    %200 = vmatpush1.msra.mxu0 %v163
    %201 = vmatprep.subr.mxu0 0.0
    %202 = vmatpush1.msra.mxu0 %v164
    %203 = vmatprep.subr.mxu0 0.0
    %204 = vmatpush1.msra.mxu0 %v165
    %205 = vmatprep.subr.mxu0 0.0
    %206 = vmatpush1.msra.mxu0 0.0
    %207 = vmatprep.subr.mxu0 0.0
    %208 = vmatpush1.msra.mxu0 0.0
    %209 = vmatprep.subr.mxu0 0.0
    %210 = vmatpush1.msra.mxu0 0.0
    %211 = vmatprep.subr.mxu0 0.0
    %212 = vmatpush1.msra.mxu0 0.0
    %213 = vmatprep.subr.mxu0 0.0
    %214 = vmatpush1.msra.mxu0 0.0
    %215 = vmatprep.subr.mxu0 0.0
    %216 = vmatpush1.msra.mxu0 0.0
    %217 = vmatprep.subr.mxu0 0.0
    %218 = vmatpush1.msra.mxu0 0.0
    %219 = vmatprep.subr.mxu0 0.0
    %220 = vmatpush1.msra.mxu0 0.0
    %221 = vmatprep.subr.mxu0 0.0
    %222 = vmatpush1.msra.mxu0 0.0
    %223 = vmatprep.subr.mxu0 0.0
    %224 = vmatpush1.msra.mxu0 0.0
    %225 = vmatprep.subr.mxu0 0.0
    %226 = vmatpush1.msra.mxu0 0.0
    %227 = vmatprep.subr.mxu0 0.0
    %228 = vmatpush1.msra.mxu0 0.0
    %229 = vmatprep.subr.mxu0 0.0
    %230 = vmatpush1.msra.mxu0 0.0
    %231 = vmatprep.subr.mxu0 0.0
    %232 = vmatpush1.msra.mxu0 0.0
    %233 = vmatprep.subr.mxu0 0.0
    %234 = vmatpush1.msra.mxu0 0.0
    %235 = vmatprep.subr.mxu0 0.0
    %236 = vmatpush1.msra.mxu0 0.0
    %237 = vmatprep.mubr.f32.mxu0 0.0
    %238 = vmatmul.mubr.f32.gmra.mrb[0].mxu0 %v148
    %v239 = vpop.f32.mrb[0].mxu0
    %v240 = vadd.f32 %v171, %v239
    %v241 = vpop.f32.mrb[0].mxu0
    %242 = vmatprep.mubr.f32.mxu0 0.0
    %243 = vmatmul.mubr.f32.gmra.mrb[0].mxu0 %v149
    %v244 = vpop.f32.mrb[0].mxu0
    %v245 = vadd.f32 %v171, %v244
    %v246 = vpop.f32.mrb[0].mxu0
    %247 = vdwg.mxu0
    %248 = vst [vmem:[%s5] sm:$0xff] %v240
    %249 = vst [vmem:[%s5 + $0x8] sm:$0xff] %v245
    // Predicated region
    $region30: #{feed_forward_prepared.1} parent=1 // pred_check
      _
    $region31: #{feed_forward_prepared.1} parent=1 // pred_check_branch
      %251 = sbr.rel (0) target = $region33
    $region32: #{feed_forward_prepared.1} parent=1 // pred_region
      _
    $region33: #{feed_forward_prepared.1} parent=1 // pred_fallthru
      _
    // Predicated region
    $region34: #{feed_forward_prepared.1} parent=1 // pred_check
      _
    $region35: #{feed_forward_prepared.1} parent=1 // pred_check_branch
      %253 = sbr.rel (0) target = $region37
    $region36: #{feed_forward_prepared.1} parent=1 // pred_region
      _
    $region37: #{feed_forward_prepared.1} parent=1 // pred_fallthru
      _
    %254 = vsyncpa [#allocation3], 1
    %255 = vsyncpa [#allocation5], 1

</llo_original>
